<compile_context>
chip_gen: v5e
topology: v5e:2x2
jax: 0.10.0
libtpu: 0.0.40
codegen_flags: <defaults>
</compile_context>

<pallas_src>
import functools

import jax
import jax.numpy as jnp
from jax.experimental import pallas as pl
from jax.experimental.pallas import tpu as pltpu


def _cdiv(a, b):
    return -(-a // b)


def _round_up(a, m):
    return _cdiv(a, m) * m


def _tpu_budgets():
    """Generation-aware (vmem_limit_bytes, fused_block_limit_bytes, num_cores)."""
    mib = 1024 * 1024
    is_v7 = False
    try:
        is_v7 = "v7" in jax.devices()[0].device_kind.lower()
    except Exception:
        pass
    num_cores = 2 if is_v7 else 1            # v7x: 2 TensorCores per chip

    vmem_cap = None
    try:
        info = pltpu.get_tpu_info()
        vmem_cap = getattr(info, "vmem_capacity_bytes", None)
    except Exception:
        pass
    if not vmem_cap:
        # Unknown -> be conservative (v7x per-TC size works everywhere).
        vmem_cap = 64 * mib
    if is_v7:
        vmem_cap = min(int(vmem_cap), 64 * mib)   # per-TC VMEM on v7x

    vmem_limit = max(32 * mib, min(int(vmem_cap) - 16 * mib, int(vmem_cap * 0.75)))
    fused_block_limit = vmem_limit - 4 * mib
    return vmem_limit, fused_block_limit, num_cores


# --------------------------------------------------------------------------- #
# Fused single-pass kernel: whole image(s) resident per grid step.
# --------------------------------------------------------------------------- #
def _se_fused_kernel(x_ref, w1t_ref, w2t_ref, o_ref):
    # x_ref: (Bt, C, HW) input dtype; w1t_ref: (C, Ch) f32 (scaled by 1/HW);
    # w2t_ref: (Ch, C) f32; o_ref: (Bt, C, HW) input dtype.
    x = x_ref[...]
    # Squeeze: f32-accumulated sum over the lane (spatial) axis.  The 1/HW of
    # the average pool is folded into w1t by the wrapper.
    s = jnp.sum(x, axis=2, dtype=jnp.float32)                          # (Bt, C)
    h1 = jnp.maximum(
        jnp.dot(s, w1t_ref[...], preferred_element_type=jnp.float32), 0.0)
    y = jnp.dot(h1, w2t_ref[...], preferred_element_type=jnp.float32)
    gate = jax.nn.sigmoid(y).astype(x.dtype)                           # (Bt, C)
    # NOTE: when Bt does not divide B the last block carries undefined batch
    # rows; this is safe because all ops here are strictly per-row and OOB
    # output rows are masked on store.
    o_ref[...] = x * gate[:, :, None]


# --------------------------------------------------------------------------- #
# Two-pass tiled fallback (large feature maps / batch-1 megacore case).
# --------------------------------------------------------------------------- #
def _se_pool_fc_kernel(x_ref, w1t_ref, w2t_ref, gate_ref, acc_ref,
                       *, hw, t, mask_tail):
    # Grid = (B, HW_tiles); HW is the inner reduction ("arbitrary") axis.
    hi = pl.program_id(1)

    @pl.when(hi == 0)
    def _():
        acc_ref[...] = jnp.zeros_like(acc_ref)

    x = x_ref[...]                                                     # (1, C, t)
    if mask_tail:
        # Tail tile of a non-128-multiple HW holds undefined data (no wrapper
        # zero-pad anymore) -> mask before the channel-sum accumulate.
        col = jax.lax.broadcasted_iota(jnp.int32, x.shape, 2)
        x = jnp.where(col < (hw - hi * t), x, jnp.zeros_like(x))
    acc_ref[...] += jnp.sum(x, axis=2, dtype=jnp.float32)              # (1, C)

    @pl.when(hi == pl.num_programs(1) - 1)
    def _():
        s = acc_ref[...]                                               # (1, C)
        h1 = jnp.maximum(
            jnp.dot(s, w1t_ref[...], preferred_element_type=jnp.float32), 0.0)
        y = jnp.dot(h1, w2t_ref[...], preferred_element_type=jnp.float32)
        gate_ref[...] = jax.nn.sigmoid(y)[:, :, None]                  # (1, C, 1)


def _se_apply_kernel(gate_ref, x_ref, o_ref):
    # gate_ref: (1, C, 1) f32;  x_ref / o_ref: (1, C, t) input dtype.
    # Undefined tail columns of a partial tile are harmless: elementwise only,
    # and OOB columns are masked on store.
    x = x_ref[...]
    o_ref[...] = x * gate_ref[...].astype(x.dtype)


# --------------------------------------------------------------------------- #
# Wrapper
# --------------------------------------------------------------------------- #
def se_layer(x, w1, w2, *,
             target_block_bytes=6 * 1024 * 1024,
             fused_block_limit_bytes=None,
             vmem_limit_bytes=None,
             donate_x=False):
    """SELayer forward.

    x : (B, C, H, W) activations (f32 or bf16).
    w1: (C//r, C)   first Linear weight (PyTorch (out, in) layout, no bias).
    w2: (C, C//r)   second Linear weight (PyTorch (out, in) layout, no bias).
    """
    b, c, h, w = x.shape
    hw = h * w
    ch = w1.shape[0]
    assert w1.shape == (ch, c) and w2.shape == (c, ch)
    itemsize = jnp.dtype(x.dtype).itemsize

    auto_vmem, auto_fused, num_cores = _tpu_budgets()
    if vmem_limit_bytes is None:
        vmem_limit_bytes = auto_vmem
    if fused_block_limit_bytes is None:
        fused_block_limit_bytes = auto_fused

    # Pre-transpose weights, cast to f32 once, and fold the 1/HW of the average
    # pool into the first FC so the kernels only need a sum-reduction.
    w1t = (jnp.transpose(w1) / float(hw)).astype(jnp.float32)          # (C, Ch)
    w2t = jnp.transpose(w2).astype(jnp.float32)                        # (Ch, C)
    weight_bytes = 2 * c * ch * 4

    # x viewed as (B, C, HW); no padding, no output slice.
    x_flat = x.reshape(b, c, hw)

    def compiler(sems):
        return pltpu.CompilerParams(dimension_semantics=sems,
                                    vmem_limit_bytes=vmem_limit_bytes)

    cost_full = pl.CostEstimate(
        flops=int(4 * b * c * ch + 2 * b * c * hw),
        transcendentals=int(b * c),
        bytes_accessed=int(2 * b * c * hw * itemsize + weight_bytes))

    per_image_bytes = c * hw * itemsize
    # Fused path: double-buffered in + out blocks of >= one image (+ weights).
    use_fused = 4 * per_image_bytes + 2 * weight_bytes <= fused_block_limit_bytes
    # v7x: a single-step fused grid leaves one TC idle; for batch < num_cores
    # and big images, take the HW-parallel two-pass path instead.
    if (use_fused and num_cores >= 2 and b < num_cores
            and per_image_bytes >= 4 * 1024 * 1024):
        use_fused = False

    if use_fused:
        # ---------------- fused single-pass path ---------------- #
        bt = int(max(1, min(b, target_block_bytes // per_image_bytes)))
        bt_vmem = max(1, (fused_block_limit_bytes - 2 * weight_bytes)
                      // (4 * per_image_bytes))
        bt = int(min(bt, bt_vmem))
        if num_cores >= 2 and b >= num_cores:
            # Keep >= num_cores grid steps so the megacore split has work (v7x).
            bt = min(bt, _cdiv(b, num_cores))
        grid_b = _cdiv(b, bt)

        out_flat = pl.pallas_call(
            _se_fused_kernel,
            out_shape=jax.ShapeDtypeStruct((b, c, hw), x.dtype),
            grid_spec=pltpu.PrefetchScalarGridSpec(
                num_scalar_prefetch=0,
                grid=(grid_b,),
                in_specs=[
                    # Block last dim == full hw (legal even if not a 128-mult).
                    pl.BlockSpec((bt, c, hw), lambda i: (i, 0, 0)),
                    # Weights: constant block index -> loaded once, resident.
                    pl.BlockSpec((c, ch), lambda i: (0, 0)),
                    pl.BlockSpec((ch, c), lambda i: (0, 0)),
                ],
                out_specs=pl.BlockSpec((bt, c, hw), lambda i: (i, 0, 0)),
            ),
            compiler_params=compiler(("parallel",)),
            cost_estimate=cost_full,
            input_output_aliases=({0: 0} if donate_x else {}),
        )(x_flat, w1t, w2t)
    else:
        # ---------------- two-pass tiled fallback ---------------- #
        # HW tile: multiple of 128, ~target_block_bytes per block, preferring a
        # tile that divides the 128-rounded HW extent.
        hwp128 = _round_up(hw, 128)
        t_max = max(128, min((target_block_bytes // (c * itemsize)) // 128 * 128,
                             hwp128))
        t = 128
        for cand in range(t_max, 127, -128):
            if hwp128 % cand == 0:
                t = cand
                break
        grid_hw = _cdiv(hw, t)
        mask_tail = (hw % t) != 0

        pool_kernel = functools.partial(_se_pool_fc_kernel,
                                        hw=hw, t=t, mask_tail=mask_tail)

        # Pass 1: per-channel sums over HW tiles, then FC + sigmoid -> (B, C, 1).
        gate = pl.pallas_call(
            pool_kernel,
            out_shape=jax.ShapeDtypeStruct((b, c, 1), jnp.float32),
            grid_spec=pltpu.PrefetchScalarGridSpec(
                num_scalar_prefetch=0,
                grid=(b, grid_hw),
                in_specs=[
                    pl.BlockSpec((1, c, t), lambda bi, hi: (bi, 0, hi)),
                    pl.BlockSpec((c, ch), lambda bi, hi: (0, 0)),
                    pl.BlockSpec((ch, c), lambda bi, hi: (0, 0)),
                ],
                out_specs=pl.BlockSpec((1, c, 1), lambda bi, hi: (bi, 0, 0)),
                scratch_shapes=[pltpu.VMEM((1, c), jnp.float32)],
            ),
            compiler_params=compiler(("parallel", "arbitrary")),
            cost_estimate=pl.CostEstimate(
                flops=int(4 * b * c * ch + b * c * hw),
                transcendentals=int(b * c),
                bytes_accessed=int(b * c * hw * itemsize + weight_bytes)),
        )(x_flat, w1t, w2t)

        # Pass 2: apply the gate with lane-dense tiles on a fully parallel grid.
        out_flat = pl.pallas_call(
            _se_apply_kernel,
            out_shape=jax.ShapeDtypeStruct((b, c, hw), x.dtype),
            grid_spec=pltpu.PrefetchScalarGridSpec(
                num_scalar_prefetch=0,
                grid=(b, grid_hw),
                in_specs=[
                    pl.BlockSpec((1, c, 1), lambda bi, hi: (bi, 0, 0)),
                    pl.BlockSpec((1, c, t), lambda bi, hi: (bi, 0, hi)),
                ],
                out_specs=pl.BlockSpec((1, c, t), lambda bi, hi: (bi, 0, hi)),
            ),
            compiler_params=compiler(("parallel", "parallel")),
            cost_estimate=pl.CostEstimate(
                flops=int(b * c * hw),
                transcendentals=0,
                bytes_accessed=int(2 * b * c * hw * itemsize)),
            input_output_aliases=({1: 0} if donate_x else {}),
        )(gate, x_flat)

    return out_flat.reshape(b, c, h, w)


def _reference(x, w1, w2):
    xf = x.astype(jnp.float32)
    avg = jnp.mean(xf, axis=(2, 3))                                    # (B, C)
    y = jnp.maximum(avg @ w1.astype(jnp.float32).T, 0.0)
    y = y @ w2.astype(jnp.float32).T
    gate = jax.nn.sigmoid(y)[:, :, None, None]                         # (B, C, 1, 1)
    return xf * gate


if __name__ == "__main__":
    # SELayer(channel=32, reduction=16) -> hidden = 2
    B, C, H, W = 2, 32, 16, 16
    R = 16
    CH = C // R

    key = jax.random.PRNGKey(0)
    kx, k1, k2, kx2 = jax.random.split(key, 4)
    x = jax.random.normal(kx, (B, C, H, W), dtype=jnp.float32)
    w1 = jax.random.normal(k1, (CH, C), dtype=jnp.float32) * 0.1       # (out, in)
    w2 = jax.random.normal(k2, (C, CH), dtype=jnp.float32) * 0.1       # (out, in)

    ref = _reference(x, w1, w2)

    # 1) Fused single-pass path (image-resident blocks, block last dim == hw).
    out = jax.block_until_ready(se_layer(x, w1, w2))
    assert out.shape == x.shape
    assert jnp.allclose(out, ref, atol=1e-4, rtol=1e-4), "fused path mismatch"

    # 2) Two-pass tiled fallback (forced via a tiny fused-block limit), multiple
    #    HW tiles, hw divisible by the tile (no tail mask).
    out2 = jax.block_until_ready(
        se_layer(x, w1, w2,
                 target_block_bytes=C * 128 * 4,
                 fused_block_limit_bytes=1))
    assert jnp.allclose(out2, ref, atol=1e-4, rtol=1e-4), "two-pass path mismatch"

    # 3) Odd spatial size (hw = 49, not a 128-multiple) + batch not divisible by
    #    the block batch: fused path with a non-128-multiple full-extent block.
    x3 = jax.random.normal(kx2, (3, C, 7, 7), dtype=jnp.float32)
    ref3 = _reference(x3, w1, w2)
    out3 = jax.block_until_ready(se_layer(x3, w1, w2))
    assert jnp.allclose(out3, ref3, atol=1e-4, rtol=1e-4), "odd-hw fused mismatch"

    # 4) Same odd spatial size through the two-pass path: exercises the in-kernel
    #    tail-tile mask (no wrapper zero pad anymore).
    out4 = jax.block_until_ready(se_layer(x3, w1, w2, fused_block_limit_bytes=1))
    assert jnp.allclose(out4, ref3, atol=1e-4, rtol=1e-4), "tail-mask mismatch"

    # 5) bf16 activations: gating multiply stays in bf16 (FC chain still f32).
    xb = x.astype(jnp.bfloat16)
    outb = jax.block_until_ready(se_layer(xb, w1, w2))
    refb = _reference(xb, w1, w2)
    assert outb.dtype == jnp.bfloat16
    assert jnp.allclose(outb.astype(jnp.float32), refb, atol=5e-2, rtol=5e-2), \
        "bf16 path mismatch"

    print("KERNEL_OK")
</pallas_src>

<mosaic_0001>
module attributes {stable_mosaic.version = 11 : i64} {
  func.func @_se_fused_kernel(%arg0: i32, %arg1: memref<2x32x256xf32, #tpu.memory_space<vmem>>, %arg2: memref<32x2xf32, #tpu.memory_space<vmem>>, %arg3: memref<2x32xf32, #tpu.memory_space<vmem>>, %arg4: memref<2x32x256xf32, #tpu.memory_space<vmem>>) attributes {dimension_semantics = [#tpu.dimension_semantics<parallel>], iteration_bounds = array<i64: 1>, scalar_prefetch = 0 : i64, scratch_operands = 0 : i64, tpu.core_type = #tpu.core_type<tc>, window_params = [{transform_indices = @transform_0, window_bounds = array<i64: 2, 32, 256>}, {pipeline_mode = #tpu.pipeline_mode<synchronous>, transform_indices = @transform_1, window_bounds = array<i64: 32, 2>}, {pipeline_mode = #tpu.pipeline_mode<synchronous>, transform_indices = @transform_2, window_bounds = array<i64: 2, 32>}, {transform_indices = @transform_3, window_bounds = array<i64: 2, 32, 256>}]} {
    %c0 = arith.constant 0 : index
    %c0_0 = arith.constant 0 : index
    %c0_1 = arith.constant 0 : index
    %0 = vector.load %arg1[%c0, %c0_0, %c0_1] : memref<2x32x256xf32, #tpu.memory_space<vmem>>, vector<2x32x256xf32>
    %cst = arith.constant dense<0.000000e+00> : vector<2x32xf32>
    %1 = vector.multi_reduction <add>, %0, %cst [2] : vector<2x32x256xf32> to vector<2x32xf32>
    %c0_2 = arith.constant 0 : index
    %c0_3 = arith.constant 0 : index
    %2 = vector.load %arg2[%c0_2, %c0_3] : memref<32x2xf32, #tpu.memory_space<vmem>>, vector<32x2xf32>
    %cst_4 = arith.constant dense<0.000000e+00> : vector<2x2xf32>
    %3 = tpu.matmul %1, %2, %cst_4 {dimension_numbers = #tpu.dot_dimension_numbers<[1], [0], [0], [1], [0, 0, 1, 1], [], []>} : vector<2x32xf32>, vector<32x2xf32>, vector<2x2xf32> -> vector<2x2xf32>
    %cst_5 = arith.constant 0.000000e+00 : f32
    %4 = vector.broadcast %cst_5 : f32 to vector<2x2xf32>
    %5 = arith.maximumf %3, %4 : vector<2x2xf32>
    %c0_6 = arith.constant 0 : index
    %c0_7 = arith.constant 0 : index
    %6 = vector.load %arg3[%c0_6, %c0_7] : memref<2x32xf32, #tpu.memory_space<vmem>>, vector<2x32xf32>
    %cst_8 = arith.constant dense<0.000000e+00> : vector<2x32xf32>
    %7 = tpu.matmul %5, %6, %cst_8 {dimension_numbers = #tpu.dot_dimension_numbers<[1], [0], [0], [1], [0, 0, 1, 1], [], []>} : vector<2x2xf32>, vector<2x32xf32>, vector<2x32xf32> -> vector<2x32xf32>
    %8 = arith.negf %7 : vector<2x32xf32>
    %9 = math.exp %8 : vector<2x32xf32>
    %cst_9 = arith.constant 1.000000e+00 : f32
    %10 = vector.broadcast %cst_9 : f32 to vector<2x32xf32>
    %11 = arith.addf %10, %9 : vector<2x32xf32>
    %12 = arith.divf %10, %11 : vector<2x32xf32>
    %13 = vector.shape_cast %12 : vector<2x32xf32> to vector<2x32x1xf32>
    %14 = vector.broadcast %13 : vector<2x32x1xf32> to vector<2x32x256xf32>
    %15 = arith.mulf %0, %14 : vector<2x32x256xf32>
    %c0_10 = arith.constant 0 : index
    %c0_11 = arith.constant 0 : index
    %c0_12 = arith.constant 0 : index
    %16 = vector.load %arg4[%c0_10, %c0_11, %c0_12] : memref<2x32x256xf32, #tpu.memory_space<vmem>>, vector<2x32x256xf32>
    tpu.vector_store %arg4[%c0_10, %c0_11, %c0_12], %15 {strides = array<i32>} : memref<2x32x256xf32, #tpu.memory_space<vmem>>, vector<2x32x256xf32>,
    return
  }
  func.func @transform_0(%arg0: i32) -> (i32, i32, i32) {
    %c0_i32 = arith.constant 0 : i32
    %c0_i32_0 = arith.constant 0 : i32
    %c0_i32_1 = arith.constant 0 : i32
    return %arg0, %c0_i32, %c0_i32_0 : i32, i32, i32
  }
  func.func @transform_1(%arg0: i32) -> (i32, i32) {
    %c0_i32 = arith.constant 0 : i32
    %c0_i32_0 = arith.constant 0 : i32
    %c0_i32_1 = arith.constant 0 : i32
    return %c0_i32, %c0_i32_0 : i32, i32
  }
  func.func @transform_2(%arg0: i32) -> (i32, i32) {
    %c0_i32 = arith.constant 0 : i32
    %c0_i32_0 = arith.constant 0 : i32
    %c0_i32_1 = arith.constant 0 : i32
    return %c0_i32, %c0_i32_0 : i32, i32
  }
  func.func @transform_3(%arg0: i32) -> (i32, i32, i32) {
    %c0_i32 = arith.constant 0 : i32
    %c0_i32_0 = arith.constant 0 : i32
    %c0_i32_1 = arith.constant 0 : i32
    return %arg0, %c0_i32, %c0_i32_0 : i32, i32, i32
  }
}

</mosaic_0001>

<llo_original>
// kernel: tpu_custom_call.1
$region0: #{tpu_custom_call.1}
  #allocation0 [shape = 'u32[]', space=smem, size = 0x4, offset = 0x4, fixed_abs, tag = 'smem constant byte address 0x4 - core index']
  #allocation1 [shape = 'u32[72,128]{1,0:T(1,128)}', space=vmem, size = 0x9000, scoped, tag = 'internal scratch']
  %s0 = inlined_call_operand.hbm [shape: f32[2,32,256], index: 0, kind: input, shape index: {}]
  %s1 = inlined_call_operand.vmem [shape: f32[32,2], index: 1, kind: input, shape index: {}]
  %s2 = inlined_call_operand.vmem [shape: f32[2,32], index: 2, kind: input, shape index: {}]
  %s3 = inlined_call_operand.hbm [shape: f32[2,32,256], index: 3, kind: output, shape index: {}]
  %s4 = sld [smem:[#allocation0]]
  $region26: #{tpu_custom_call.1} parent=0
    _
  %s6 = ssub.s32 1, %s4
  %s7 = scalar_select 0, %s6, %s4
  $region1: #{tpu_custom_call.1} parent=0
    #allocation2 [shape = 'u8[65536]{0}', space=vmem, size = 0x10000, scoped, tag = 'input window, operand 0, single buffered']
    #allocation3 [shape = 's32[1]{0}', space=sflag, size = 0x4, scoped, tag = 'scoped memory for tpu_custom_call.1']
    #allocation4 [shape = 's32[1]{0}', space=sflag, size = 0x4, scoped, tag = 'scoped memory for tpu_custom_call.1']
    #allocation5 [shape = 'u8[65536]{0}', space=vmem, size = 0x10000, scoped, tag = 'output window, operand 0, single buffered']
    %8 = vsyncpa [#allocation3], 0
    %9 = vsyncpa [#allocation4], 0
    // Predicated region
    $region2: #{tpu_custom_call.1} parent=1 // pred_check
      _
    $region3: #{tpu_custom_call.1} parent=1 // pred_check_branch
      %11 = sbr.rel (0) target = $region5
    $region4: #{tpu_custom_call.1} parent=1 // pred_region
      %13 = vsyncadd [#allocation3], 0
      %s14 = sshll.u32 %s0, 4
      %s15 = int_to_ptr.hbm [resolvable:$true] %s14
      %s16 = sshll.u32 [#allocation2], 4
      %s17 = int_to_ptr.vmem [resolvable:$true] %s16
      %22 = dma.hbm_to_vmem [thread:$0]  %s15, 2048, %s17, [#allocation3], 256, 256, 16
    $region5: #{tpu_custom_call.1} parent=1 // pred_fallthru
      _
    // Predicated region
    $region6: #{tpu_custom_call.1} parent=1 // pred_check
      _
    $region7: #{tpu_custom_call.1} parent=1 // pred_check_branch
      %24 = sbr.rel (0) target = $region9
    $region8: #{tpu_custom_call.1} parent=1 // pred_region
      _
    $region9: #{tpu_custom_call.1} parent=1 // pred_fallthru
      _
    // Predicated region
    $region10: #{tpu_custom_call.1} parent=1 // pred_check
      _
    $region11: #{tpu_custom_call.1} parent=1 // pred_check_branch
      %26 = sbr.rel (0) target = $region13
    $region12: #{tpu_custom_call.1} parent=1 // pred_region
      _
    $region13: #{tpu_custom_call.1} parent=1 // pred_fallthru
      _
    // Predicated region
    $region14: #{tpu_custom_call.1} parent=1 // pred_check
      _
    $region15: #{tpu_custom_call.1} parent=1 // pred_check_branch
      %28 = sbr.rel (0) target = $region17
    $region16: #{tpu_custom_call.1} parent=1 // pred_region
      %30 = dma.done [#allocation3], 2048
    $region17: #{tpu_custom_call.1} parent=1 // pred_fallthru
      _
    %v31 = vld [vmem:[#allocation2] sm:$0xff]
    %v32 = vld [vmem:[#allocation2 + $0x8] sm:$0xff]
    %v33 = vld [vmem:[#allocation2 + $0x10] sm:$0xff]
    %v34 = vld [vmem:[#allocation2 + $0x18] sm:$0xff]
    %v35 = vld [vmem:[#allocation2 + $0x20] sm:$0xff]
    %v36 = vld [vmem:[#allocation2 + $0x28] sm:$0xff]
    %v37 = vld [vmem:[#allocation2 + $0x30] sm:$0xff]
    %v38 = vld [vmem:[#allocation2 + $0x38] sm:$0xff]
    %v39 = vld [vmem:[#allocation2 + $0x40] sm:$0xff]
    %v40 = vld [vmem:[#allocation2 + $0x48] sm:$0xff]
    %v41 = vld [vmem:[#allocation2 + $0x50] sm:$0xff]
    %v42 = vld [vmem:[#allocation2 + $0x58] sm:$0xff]
    %v43 = vld [vmem:[#allocation2 + $0x60] sm:$0xff]
    %v44 = vld [vmem:[#allocation2 + $0x68] sm:$0xff]
    %v45 = vld [vmem:[#allocation2 + $0x70] sm:$0xff]
    %v46 = vld [vmem:[#allocation2 + $0x78] sm:$0xff]
    %v47 = vadd.f32 %v31, %v32
    %48 = vadd.xlane.f32.xlu0 %v47
    %v49 = vpop.xlane.xlu0 %48
    %v50 = vadd.f32 %v33, %v34
    %51 = vadd.xlane.f32.xlu0 %v50
    %v52 = vpop.xlane.xlu0 %51
    %v53 = vadd.f32 %v35, %v36
    %54 = vadd.xlane.f32.xlu0 %v53
    %v55 = vpop.xlane.xlu0 %54
    %v56 = vadd.f32 %v37, %v38
    %57 = vadd.xlane.f32.xlu0 %v56
    %v58 = vpop.xlane.xlu0 %57
    %v59 = vadd.f32 %v39, %v40
    %60 = vadd.xlane.f32.xlu0 %v59
    %v61 = vpop.xlane.xlu0 %60
    %v62 = vadd.f32 %v41, %v42
    %63 = vadd.xlane.f32.xlu0 %v62
    %v64 = vpop.xlane.xlu0 %63
    %v65 = vadd.f32 %v43, %v44
    %66 = vadd.xlane.f32.xlu0 %v65
    %v67 = vpop.xlane.xlu0 %66
    %v68 = vadd.f32 %v45, %v46
    %69 = vadd.xlane.f32.xlu0 %v68
    %v70 = vpop.xlane.xlu0 %69
    %v71 = vld [vmem:[%s1] sm:$0xff]
    %v72 = vld [vmem:[%s1 + $0x8] sm:$0xff]
    %v73 = vld [vmem:[%s1 + $0x10] sm:$0xff]
    %v74 = vld [vmem:[%s1 + $0x18] sm:$0xff]
    %v83 = vlaneseq
    %v84 = vand.u32 %v83, 127
    %v85 = vperm.slane %v49, %v84
    %v86 = vadd.s32 %v84, 4294967288
    %v87 = vperm.slane %v52, %v86
    %vm88 = vcmask 130112
    %v89 = vsel %vm88, %v87, %v85
    %v90 = vadd.s32 %v84, 4294967280
    %v91 = vperm.slane %v55, %v90
    %vm92 = vcmask 195712
    %v93 = vsel %vm92, %v91, %v89
    %v94 = vadd.s32 %v84, 4294967272
    %v95 = vperm.slane %v58, %v94
    %vm96 = vcmask 261312
    %v97 = vsel %vm96, %v95, %v93
    %v98 = vperm.slane %v61, %v84
    %v99 = vperm.slane %v64, %v86
    %v100 = vsel %vm88, %v99, %v98
    %v101 = vperm.slane %v67, %v90
    %v102 = vsel %vm92, %v101, %v100
    %v103 = vperm.slane %v70, %v94
    %v104 = vsel %vm96, %v103, %v102
    %vm105 = vcmask 1041409
    %v106 = vsel %vm105, %v104, %v97
    %vm107 = vcmask 261120
    %v108 = vsel %vm107, %v106, 0
    %110 = vmatpush.msra.mxu0 0.0
    %111 = vmatpush.msra.mxu0 0.0
    %112 = vmatpush.msra.mxu0 0.0
    %113 = vmatpush.msra.mxu0 0.0
    %114 = vmatpush.msra.mxu0 0.0
    %115 = vmatpush.msra.mxu0 0.0
    %116 = vmatpush.msra.mxu0 0.0
    %117 = vmatpush.msra.mxu0 0.0
    %118 = vmatpush.msra.mxu0 0.0
    %119 = vmatpush.msra.mxu0 0.0
    %120 = vmatpush.msra.mxu0 0.0
    %121 = vmatpush.msra.mxu0 0.0
    %122 = vmatpush.msra.mxu0 %v74
    %123 = vmatpush.msra.mxu0 %v73
    %124 = vmatpush.msra.mxu0 %v72
    %125 = vmatpush.msra.mxu0 %v71
    %126 = vmatmul.f32.gmra.mxu0 %v108
    %v127 = vpop.f32.mrf.mxu0
    %v128 = vadd.f32 0.0, %v127
    %129 = vdwg.mxu0
    %v130 = vmax.f32 %v128, 0.0
    %v131 = vld [vmem:[%s2] sm:$0x3]
    %vm132 = vcmask 15360
    %v134 = vsel %vm132, %v130, 0
    %vm136 = vcmask 1041408
    %v138 = vsel %vm136, %v131, 0
    %140 = vmatpush.msra.mxu0 0.0
    %141 = vmatpush.msra.mxu0 0.0
    %142 = vmatpush.msra.mxu0 0.0
    %143 = vmatpush.msra.mxu0 0.0
    %144 = vmatpush.msra.mxu0 0.0
    %145 = vmatpush.msra.mxu0 0.0
    %146 = vmatpush.msra.mxu0 0.0
    %147 = vmatpush.msra.mxu0 0.0
    %148 = vmatpush.msra.mxu0 0.0
    %149 = vmatpush.msra.mxu0 0.0
    %150 = vmatpush.msra.mxu0 0.0
    %151 = vmatpush.msra.mxu0 0.0
    %152 = vmatpush.msra.mxu0 0.0
    %153 = vmatpush.msra.mxu0 0.0
    %154 = vmatpush.msra.mxu0 0.0
    %155 = vmatpush.msra.mxu0 %v138
    %156 = vmatmul.f32.gmra.mxu0 %v134
    %v157 = vpop.f32.mrf.mxu0
    %v158 = vadd.f32 0.0, %v157
    %159 = vdwg.mxu0
    %v160 = vxor.u32 %v158, 2147483648
    %v161 = vmul.f32 %v160, 1.442695
    %v162 = vpow.pop %v161
    %v163 = vadd.f32 %v162, 1.0
    %v164 = vrcp.pop %v163
    %v165 = vmul.f32 %v163, %v164
    %v166 = vsub.f32 1.0, %v165
    %v167 = vmul.f32 %v164, %v166
    %v168 = vadd.f32 %v164, %v167
    %vm169 = vweird.f32 %v163
    %vm170 = vweird.f32 %v164
    %vm171 = vmor %vm169, %vm170
    %v172 = vsel %vm171, %v164, %v168
    %v173 = vand.u32 2147483647, %v163
    %vm174 = vcmp.eq.f32.partialorder %v173, 8.507059e+37
    %v175 = vand.u32 %v163, 2147483648
    %v176 = vor.u32 1.1754944e-38, %v175
    %v177 = vsel %vm174, %v176, %v172
    %v178 = vmul.f32 1.0, %v177
    %v179 = vperm.slane %v178, 0
    %v180 = vlaneseq
    %v181 = vshrl.u32 %v180, 7
    %183 = vset.pattern.permute.xlu0 %v181
    %184 = vperm.xlu0 %183, %v179
    %v185 = vpop.permute.xlu0 %184
    %v186 = vlaneseq
    %v187 = vshrl.u32 %v186, 7
    %v188 = vadd.s32 %v187, 8
    %189 = vset.pattern.permute.xlu0 %v188
    %190 = vperm.xlu0 %189, %v179
    %v191 = vpop.permute.xlu0 %190
    %v192 = vlaneseq
    %v193 = vshrl.u32 %v192, 7
    %v194 = vadd.s32 %v193, 16
    %195 = vset.pattern.permute.xlu0 %v194
    %196 = vperm.xlu0 %195, %v179
    %v197 = vpop.permute.xlu0 %196
    %v198 = vlaneseq
    %v199 = vshrl.u32 %v198, 7
    %v200 = vadd.s32 %v199, 24
    %201 = vset.pattern.permute.xlu0 %v200
    %202 = vperm.xlu0 %201, %v179
    %v203 = vpop.permute.xlu0 %202
    %v204 = vperm.slane %v178, 1
    %v205 = vlaneseq
    %v206 = vshrl.u32 %v205, 7
    %208 = vset.pattern.permute.xlu0 %v206
    %209 = vperm.xlu0 %208, %v204
    %v210 = vpop.permute.xlu0 %209
    %v211 = vlaneseq
    %v212 = vshrl.u32 %v211, 7
    %v213 = vadd.s32 %v212, 8
    %214 = vset.pattern.permute.xlu0 %v213
    %215 = vperm.xlu0 %214, %v204
    %v216 = vpop.permute.xlu0 %215
    %v217 = vlaneseq
    %v218 = vshrl.u32 %v217, 7
    %v219 = vadd.s32 %v218, 16
    %220 = vset.pattern.permute.xlu0 %v219
    %221 = vperm.xlu0 %220, %v204
    %v222 = vpop.permute.xlu0 %221
    %v223 = vlaneseq
    %v224 = vshrl.u32 %v223, 7
    %v225 = vadd.s32 %v224, 24
    %226 = vset.pattern.permute.xlu0 %v225
    %227 = vperm.xlu0 %226, %v204
    %v228 = vpop.permute.xlu0 %227
    %v229 = vmul.f32 %v31, %v185
    %v230 = vmul.f32 %v32, %v185
    %v231 = vmul.f32 %v33, %v191
    %v232 = vmul.f32 %v34, %v191
    %v233 = vmul.f32 %v35, %v197
    %v234 = vmul.f32 %v36, %v197
    %v235 = vmul.f32 %v37, %v203
    %v236 = vmul.f32 %v38, %v203
    %v237 = vmul.f32 %v39, %v210
    %v238 = vmul.f32 %v40, %v210
    %v239 = vmul.f32 %v41, %v216
    %v240 = vmul.f32 %v42, %v216
    %v241 = vmul.f32 %v43, %v222
    %v242 = vmul.f32 %v44, %v222
    %v243 = vmul.f32 %v45, %v228
    %v244 = vmul.f32 %v46, %v228
    %245 = vst [vmem:[#allocation5] sm:$0xff] %v229
    %246 = vst [vmem:[#allocation5 + $0x8] sm:$0xff] %v230
    %247 = vst [vmem:[#allocation5 + $0x10] sm:$0xff] %v231
    %248 = vst [vmem:[#allocation5 + $0x18] sm:$0xff] %v232
    %249 = vst [vmem:[#allocation5 + $0x20] sm:$0xff] %v233
    %250 = vst [vmem:[#allocation5 + $0x28] sm:$0xff] %v234
    %251 = vst [vmem:[#allocation5 + $0x30] sm:$0xff] %v235
    %252 = vst [vmem:[#allocation5 + $0x38] sm:$0xff] %v236
    %253 = vst [vmem:[#allocation5 + $0x40] sm:$0xff] %v237
    %254 = vst [vmem:[#allocation5 + $0x48] sm:$0xff] %v238
    %255 = vst [vmem:[#allocation5 + $0x50] sm:$0xff] %v239
    %256 = vst [vmem:[#allocation5 + $0x58] sm:$0xff] %v240
    %257 = vst [vmem:[#allocation5 + $0x60] sm:$0xff] %v241
    %258 = vst [vmem:[#allocation5 + $0x68] sm:$0xff] %v242
    %259 = vst [vmem:[#allocation5 + $0x70] sm:$0xff] %v243
    %260 = vst [vmem:[#allocation5 + $0x78] sm:$0xff] %v244
    // Predicated region
    $region18: #{tpu_custom_call.1} parent=1 // pred_check
      _
    $region19: #{tpu_custom_call.1} parent=1 // pred_check_branch
      %262 = sbr.rel (0) target = $region21
    $region20: #{tpu_custom_call.1} parent=1 // pred_region
      %264 = vsyncadd [#allocation4], 0
      %s265 = sshll.u32 [#allocation5], 4
      %s266 = int_to_ptr.vmem [resolvable:$true] %s265
      %s267 = sshll.u32 %s3, 4
      %s268 = int_to_ptr.hbm [resolvable:$true] %s267
      %273 = dma.vmem_to_hbm [thread:$0]  %s266, 2048, %s268, [#allocation4], 256, 256, 16
    $region21: #{tpu_custom_call.1} parent=1 // pred_fallthru
      _
    // Predicated region
    $region22: #{tpu_custom_call.1} parent=1 // pred_check
      _
    $region23: #{tpu_custom_call.1} parent=1 // pred_check_branch
      %275 = sbr.rel (0) target = $region25
    $region24: #{tpu_custom_call.1} parent=1 // pred_region
      %277 = dma.done [#allocation4], 2048
    $region25: #{tpu_custom_call.1} parent=1 // pred_fallthru
      _
    %278 = vsyncpa [#allocation3], 1
    %279 = vsyncpa [#allocation4], 1

</llo_original>
